<compile_context>
chip_gen: v7x
topology: tpu7x:2x2x1
jax: 0.10.0
libtpu: 0.0.40
codegen_flags: <defaults>
</compile_context>

<pallas_src>
import math
from functools import partial

import jax
import jax.numpy as jnp
from jax.experimental import pallas as pl
from jax.experimental.pallas import tpu as pltpu

LANE = 128


def _kernel(x_ref, w_ref, b_ref, o_ref):
    # x_ref: (r, in_f*128)   w_ref: (in_f*128, out_f*128)   b_ref: (1, out_f*128)
    acc = jnp.dot(x_ref[...], w_ref[...], preferred_element_type=jnp.float32)
    # hardsigmoid affine already folded into W/b -> just clamp to [0, 1].
    o_ref[...] = jnp.clip(acc + b_ref[...], 0.0, 1.0).astype(o_ref.dtype)


def _round_up(x: int, n: int) -> int:
    return ((x + n - 1) // n) * n


@partial(jax.jit, static_argnames=("r_target",))
def linear_hardsigmoid(x, w, b, *, r_target: int = 3072):
    """hardsigmoid(x @ w.T + b).  w: (out_f, in_f) torch layout, b: (out_f,)."""
    out_f, in_f = w.shape
    assert x.shape[-1] == in_f
    lead = x.shape[:-1]
    m = math.prod(lead) if lead else 1

    # ---- fold hardsigmoid affine into the tiny weights/bias ----------------
    w_fold = w.astype(jnp.float32) / 6.0            # (out_f, in_f)
    b_fold = (b.astype(jnp.float32) + 3.0) / 6.0    # (out_f,)

    # Block-diagonal "super-lane" weights: 128 copies of w_fold^T on the
    # diagonal.  w_big[t*in_f + k, t*out_f + j] = w_fold[j, k].
    eye = jnp.eye(LANE, dtype=jnp.float32)
    w_big = jnp.einsum("st,kj->sktj", eye, w_fold.T).reshape(
        in_f * LANE, out_f * LANE)
    b_big = jnp.tile(b_fold, LANE).reshape(1, out_f * LANE)

    # ---- tiling -------------------------------------------------------------
    rows = pl.cdiv(m, LANE)                         # 128-sample rows
    num_tiles = max(1, pl.cdiv(rows, r_target))
    if num_tiles == 1 and rows > 8:
        num_tiles = 2                               # let both v7x TCs work
    r_eff = max(8, _round_up(pl.cdiv(rows, num_tiles), 8))
    rows_pad = num_tiles * r_eff
    m_pad = rows_pad * LANE

    x2d = x.reshape(m, in_f)
    if m_pad != m:
        x2d = jnp.pad(x2d, ((0, m_pad - m), (0, 0)))
    # Free, contiguous reshape: row r holds 128 consecutive samples with
    # features interleaved (period in_f) — matched by the block-diag weights.
    x_blk = x2d.reshape(rows_pad, in_f * LANE)

    out_blk = pl.pallas_call(
        _kernel,
        out_shape=jax.ShapeDtypeStruct((rows_pad, out_f * LANE), x.dtype),
        grid=(num_tiles,),
        in_specs=[
            pl.BlockSpec((r_eff, in_f * LANE), lambda i: (i, 0)),            # x tile
            pl.BlockSpec((in_f * LANE, out_f * LANE), lambda i: (0, 0)),     # W_big
            pl.BlockSpec((1, out_f * LANE), lambda i: (0, 0)),               # b_big
        ],
        out_specs=pl.BlockSpec((r_eff, out_f * LANE), lambda i: (i, 0)),
        compiler_params=pltpu.CompilerParams(
            dimension_semantics=("parallel",),
            vmem_limit_bytes=48 * 1024 * 1024,
        ),
        cost_estimate=pl.CostEstimate(
            flops=int(2 * rows_pad * (in_f * LANE) * (out_f * LANE)),
            transcendentals=0,
            bytes_accessed=int(rows_pad * LANE * (in_f + out_f) * 4),
        ),
    )(x_blk, w_big, b_big)

    out2d = out_blk.reshape(m_pad, out_f)[:m]       # drop padded samples
    return out2d.reshape(*lead, out_f)


if __name__ == "__main__":
    key = jax.random.PRNGKey(0)
    kx, kw, kb, kx2 = jax.random.split(key, 4)

    # Small shapes consistent with the module: Linear(3, 4) over the last dim.
    # (The original script's (1,3,64,64) input is incompatible with Linear(3,4);
    #  we use last-dim-3 inputs as the forward pass implies.)
    x = jax.random.normal(kx, (2, 8, 16, 3), dtype=jnp.float32)

    # Deterministic "Linear(3, 4)" parameters (torch layout: weight (out, in)).
    bound = 1.0 / (3.0 ** 0.5)
    w = jax.random.uniform(kw, (4, 3), minval=-bound, maxval=bound,
                           dtype=jnp.float32)
    b = jax.random.uniform(kb, (4,), minval=-bound, maxval=bound,
                           dtype=jnp.float32)

    out = linear_hardsigmoid(x, w, b)
    jax.block_until_ready(out)

    ref = jnp.clip(x @ w.T + b + 3.0, 0.0, 6.0) / 6.0
    assert out.shape == (2, 8, 16, 4)
    assert jnp.allclose(out, ref, atol=1e-5, rtol=1e-5)

    # Ragged-M case (exercises the padding path).
    x_r = jax.random.normal(kx2, (5, 11, 3), dtype=jnp.float32)
    out_r = linear_hardsigmoid(x_r, w, b)
    jax.block_until_ready(out_r)
    ref_r = jnp.clip(x_r @ w.T + b + 3.0, 0.0, 6.0) / 6.0
    assert out_r.shape == (5, 11, 4)
    assert jnp.allclose(out_r, ref_r, atol=1e-5, rtol=1e-5)

    print("KERNEL_OK")
</pallas_src>

<mosaic_0001>
module attributes {stable_mosaic.version = 11 : i64} {
  func.func @_kernel(%arg0: i32, %arg1: memref<8x384xf32, #tpu.memory_space<vmem>>, %arg2: memref<384x512xf32, #tpu.memory_space<vmem>>, %arg3: memref<1x512xf32, #tpu.memory_space<vmem>>, %arg4: memref<8x512xf32, #tpu.memory_space<vmem>>) attributes {dimension_semantics = [#tpu.dimension_semantics<parallel>], iteration_bounds = array<i64: 1>, scalar_prefetch = 0 : i64, scratch_operands = 0 : i64, tpu.core_type = #tpu.core_type<tc>, window_params = [{transform_indices = @transform_0, window_bounds = array<i64: 8, 384>}, {pipeline_mode = #tpu.pipeline_mode<synchronous>, transform_indices = @transform_1, window_bounds = array<i64: 384, 512>}, {pipeline_mode = #tpu.pipeline_mode<synchronous>, transform_indices = @transform_2, window_bounds = array<i64: 1, 512>}, {transform_indices = @transform_3, window_bounds = array<i64: 8, 512>}]} {
    %c0 = arith.constant 0 : index
    %c0_0 = arith.constant 0 : index
    %0 = vector.load %arg1[%c0, %c0_0] : memref<8x384xf32, #tpu.memory_space<vmem>>, vector<8x384xf32>
    %c0_1 = arith.constant 0 : index
    %c0_2 = arith.constant 0 : index
    %1 = vector.load %arg2[%c0_1, %c0_2] : memref<384x512xf32, #tpu.memory_space<vmem>>, vector<384x512xf32>
    %cst = arith.constant dense<0.000000e+00> : vector<8x512xf32>
    %2 = tpu.matmul %0, %1, %cst {dimension_numbers = #tpu.dot_dimension_numbers<[1], [0], [0], [1], [0, 0, 1, 1], [], []>} : vector<8x384xf32>, vector<384x512xf32>, vector<8x512xf32> -> vector<8x512xf32>
    %c0_3 = arith.constant 0 : index
    %c0_4 = arith.constant 0 : index
    %3 = vector.load %arg3[%c0_3, %c0_4] : memref<1x512xf32, #tpu.memory_space<vmem>>, vector<1x512xf32>
    %4 = vector.broadcast %3 : vector<1x512xf32> to vector<8x512xf32>
    %5 = arith.addf %2, %4 : vector<8x512xf32>
    %cst_5 = arith.constant 0.000000e+00 : f32
    %cst_6 = arith.constant 1.000000e+00 : f32
    %6 = vector.broadcast %cst_5 : f32 to vector<8x512xf32>
    %7 = arith.maximumf %6, %5 : vector<8x512xf32>
    %8 = vector.broadcast %cst_6 : f32 to vector<8x512xf32>
    %9 = arith.minimumf %8, %7 : vector<8x512xf32>
    %c0_7 = arith.constant 0 : index
    %c0_8 = arith.constant 0 : index
    %10 = vector.load %arg4[%c0_7, %c0_8] : memref<8x512xf32, #tpu.memory_space<vmem>>, vector<8x512xf32>
    tpu.vector_store %arg4[%c0_7, %c0_8], %9 {strides = array<i32>} : memref<8x512xf32, #tpu.memory_space<vmem>>, vector<8x512xf32>,
    return
  }
  func.func @transform_0(%arg0: i32) -> (i32, i32) {
    %c0_i32 = arith.constant 0 : i32
    %c0_i32_0 = arith.constant 0 : i32
    return %arg0, %c0_i32 : i32, i32
  }
  func.func @transform_1(%arg0: i32) -> (i32, i32) {
    %c0_i32 = arith.constant 0 : i32
    %c0_i32_0 = arith.constant 0 : i32
    %c0_i32_1 = arith.constant 0 : i32
    return %c0_i32, %c0_i32_0 : i32, i32
  }
  func.func @transform_2(%arg0: i32) -> (i32, i32) {
    %c0_i32 = arith.constant 0 : i32
    %c0_i32_0 = arith.constant 0 : i32
    %c0_i32_1 = arith.constant 0 : i32
    return %c0_i32, %c0_i32_0 : i32, i32
  }
  func.func @transform_3(%arg0: i32) -> (i32, i32) {
    %c0_i32 = arith.constant 0 : i32
    %c0_i32_0 = arith.constant 0 : i32
    return %arg0, %c0_i32 : i32, i32
  }
}

</mosaic_0001>

<llo_original>
// kernel: tile.8
$region0: #{tile.8}
  #allocation0 [shape = 's32[1]{0}', space=sflag, size = 0x4, scoped, tag = 'scoped memory for tile.8']
  %s0 = inlined_call_operand.vmem [shape: f32[4], index: 0, kind: input, shape index: {}]
  %s1 = inlined_call_operand.vmem [shape: f32[128,4], index: 1, kind: output, shape index: {}]
  // Predicated region
  $region2: #{tile.8} parent=0 // pred_check
    _
  $region3: #{tile.8} parent=0 // pred_check_branch
    %3 = sbr.rel (0) target = $region5
  $region4: #{tile.8} parent=0 // pred_region
    _
  $region5: #{tile.8} parent=0 // pred_fallthru
    _
  %v4 = vld [vmem:[%s0] ss:$0 sm:$0xff]
  %5 = vst [vmem:[%s1] sm:$0xff] %v4
  %s6 = scalar_lea.vmem %s1, 8
  %7 = vst [vmem:[%s6] sm:$0xff] %v4
  %s8 = scalar_lea.vmem %s1, 16
  %9 = vst [vmem:[%s8] sm:$0xff] %v4
  %s10 = scalar_lea.vmem %s1, 24
  %11 = vst [vmem:[%s10] sm:$0xff] %v4
  %s12 = scalar_lea.vmem %s1, 32
  %13 = vst [vmem:[%s12] sm:$0xff] %v4
  %s14 = scalar_lea.vmem %s1, 40
  %15 = vst [vmem:[%s14] sm:$0xff] %v4
  %s16 = scalar_lea.vmem %s1, 48
  %17 = vst [vmem:[%s16] sm:$0xff] %v4
  %s18 = scalar_lea.vmem %s1, 56
  %19 = vst [vmem:[%s18] sm:$0xff] %v4
  %s20 = scalar_lea.vmem %s1, 64
  %21 = vst [vmem:[%s20] sm:$0xff] %v4
  %s22 = scalar_lea.vmem %s1, 72
  %23 = vst [vmem:[%s22] sm:$0xff] %v4
  %s24 = scalar_lea.vmem %s1, 80
  %25 = vst [vmem:[%s24] sm:$0xff] %v4
  %s26 = scalar_lea.vmem %s1, 88
  %27 = vst [vmem:[%s26] sm:$0xff] %v4
  %s28 = scalar_lea.vmem %s1, 96
  %29 = vst [vmem:[%s28] sm:$0xff] %v4
  %s30 = scalar_lea.vmem %s1, 104
  %31 = vst [vmem:[%s30] sm:$0xff] %v4
  %s32 = scalar_lea.vmem %s1, 112
  %33 = vst [vmem:[%s32] sm:$0xff] %v4
  %s34 = scalar_lea.vmem %s1, 120
  %35 = vst [vmem:[%s34] sm:$0xff] %v4

// kernel: tile.9
$region0: #{tile.9}
  %s0 = inlined_call_operand.vmem [shape: f32[128,4], index: 0, kind: input, shape index: {}]
  %s1 = inlined_call_operand.vmem [shape: f32[1,512], index: 1, kind: output, shape index: {}]
  $region1: #{tile.9} parent=0
    #allocation0 [shape = 'u8[16384]{0}', space=vmem, size = 0x4000, scoped, tag = 'scoped mem for output reshape']
    %v2 = vld [vmem:[%s0] sm:$0x1]
    %s3 = scalar_lea.vmem %s0, 31
    %v4 = vld [vmem:[%s3] sm:$0x2]
    %vm5 = vcmask 1041409
    %v6 = vsel %vm5, %v4, %v2
    %s7 = scalar_lea.vmem %s0, 62
    %v8 = vld [vmem:[%s7] sm:$0x4]
    %vm9 = vcmask 1042434
    %v10 = vsel %vm9, %v8, %v6
    %s11 = scalar_lea.vmem %s0, 93
    %v12 = vld [vmem:[%s11] sm:$0x8]
    %vm13 = vcmask 1043459
    %v14 = vsel %vm13, %v12, %v10
    %vm15 = vcmask 31744
    %16 = vst.msk [vmem:[#allocation0] ss:$8 sm:$0xf] %vm15, %v14
    %s17 = scalar_lea.vmem %s0, 31
    %v18 = vld [vmem:[%s17] sm:$0x1]
    %s19 = scalar_lea.vmem %s0, 62
    %v20 = vld [vmem:[%s19] sm:$0x2]
    %vm21 = vcmask 1041409
    %v22 = vsel %vm21, %v20, %v18
    %s23 = scalar_lea.vmem %s0, 93
    %v24 = vld [vmem:[%s23] sm:$0x4]
    %vm25 = vcmask 1042434
    %v26 = vsel %vm25, %v24, %v22
    %s27 = scalar_lea.vmem %s0, 124
    %v28 = vld [vmem:[%s27] sm:$0x8]
    %vm29 = vcmask 1043459
    %v30 = vsel %vm29, %v28, %v26
    %31 = vrot.lane.b32.xlu0 %v30, 124
    %v32 = vpop.permute.xlu0 %31
    %vm33 = vcmask 1048544
    %34 = vst.msk [vmem:[#allocation0] ss:$8 sm:$0xf] %vm33, %v32
    %s35 = scalar_lea.vmem %s0, 30
    %v36 = vld [vmem:[%s35] sm:$0x1]
    %s37 = scalar_lea.vmem %s0, 61
    %v38 = vld [vmem:[%s37] sm:$0x2]
    %vm39 = vcmask 1041409
    %v40 = vsel %vm39, %v38, %v36
    %s41 = scalar_lea.vmem %s0, 92
    %v42 = vld [vmem:[%s41] sm:$0x4]
    %vm43 = vcmask 1042434
    %v44 = vsel %vm43, %v42, %v40
    %s45 = scalar_lea.vmem %s0, 123
    %v46 = vld [vmem:[%s45] sm:$0x8]
    %vm47 = vcmask 1043459
    %v48 = vsel %vm47, %v46, %v44
    %49 = vrot.lane.b32.xlu0 %v48, 120
    %v50 = vpop.permute.xlu0 %49
    %vm51 = vcmask 1015744
    %52 = vst.msk [vmem:[#allocation0] ss:$8 sm:$0xf] %vm51, %v50
    %s53 = scalar_lea.vmem %s0, 29
    %v54 = vld [vmem:[%s53] sm:$0x1]
    %s55 = scalar_lea.vmem %s0, 60
    %v56 = vld [vmem:[%s55] sm:$0x2]
    %vm57 = vcmask 1041409
    %v58 = vsel %vm57, %v56, %v54
    %s59 = scalar_lea.vmem %s0, 91
    %v60 = vld [vmem:[%s59] sm:$0x4]
    %vm61 = vcmask 1042434
    %v62 = vsel %vm61, %v60, %v58
    %s63 = scalar_lea.vmem %s0, 122
    %v64 = vld [vmem:[%s63] sm:$0x8]
    %vm65 = vcmask 1043459
    %v66 = vsel %vm65, %v64, %v62
    %67 = vrot.lane.b32.xlu0 %v66, 116
    %v68 = vpop.permute.xlu0 %67
    %vm69 = vcmask 982944
    %70 = vst.msk [vmem:[#allocation0] ss:$8 sm:$0xf] %vm69, %v68
    %s71 = scalar_lea.vmem %s0, 28
    %v72 = vld [vmem:[%s71] sm:$0x1]
    %s73 = scalar_lea.vmem %s0, 59
    %v74 = vld [vmem:[%s73] sm:$0x2]
    %vm75 = vcmask 1041409
    %v76 = vsel %vm75, %v74, %v72
    %s77 = scalar_lea.vmem %s0, 90
    %v78 = vld [vmem:[%s77] sm:$0x4]
    %vm79 = vcmask 1042434
    %v80 = vsel %vm79, %v78, %v76
    %s81 = scalar_lea.vmem %s0, 121
    %v82 = vld [vmem:[%s81] sm:$0x8]
    %vm83 = vcmask 1043459
    %v84 = vsel %vm83, %v82, %v80
    %85 = vrot.lane.b32.xlu0 %v84, 112
    %v86 = vpop.permute.xlu0 %85
    %vm87 = vcmask 950144
    %88 = vst.msk [vmem:[#allocation0] ss:$8 sm:$0xf] %vm87, %v86
    %s89 = scalar_lea.vmem %s0, 27
    %v90 = vld [vmem:[%s89] sm:$0x1]
    %s91 = scalar_lea.vmem %s0, 58
    %v92 = vld [vmem:[%s91] sm:$0x2]
    %vm93 = vcmask 1041409
    %v94 = vsel %vm93, %v92, %v90
    %s95 = scalar_lea.vmem %s0, 89
    %v96 = vld [vmem:[%s95] sm:$0x4]
    %vm97 = vcmask 1042434
    %v98 = vsel %vm97, %v96, %v94
    %s99 = scalar_lea.vmem %s0, 120
    %v100 = vld [vmem:[%s99] sm:$0x8]
    %vm101 = vcmask 1043459
    %v102 = vsel %vm101, %v100, %v98
    %103 = vrot.lane.b32.xlu0 %v102, 108
    %v104 = vpop.permute.xlu0 %103
    %vm105 = vcmask 917344
    %106 = vst.msk [vmem:[#allocation0] ss:$8 sm:$0xf] %vm105, %v104
    %s107 = scalar_lea.vmem %s0, 26
    %v108 = vld [vmem:[%s107] sm:$0x1]
    %s109 = scalar_lea.vmem %s0, 57
    %v110 = vld [vmem:[%s109] sm:$0x2]
    %vm111 = vcmask 1041409
    %v112 = vsel %vm111, %v110, %v108
    %s113 = scalar_lea.vmem %s0, 88
    %v114 = vld [vmem:[%s113] sm:$0x4]
    %vm115 = vcmask 1042434
    %v116 = vsel %vm115, %v114, %v112
    %s117 = scalar_lea.vmem %s0, 119
    %v118 = vld [vmem:[%s117] sm:$0x8]
    %vm119 = vcmask 1043459
    %v120 = vsel %vm119, %v118, %v116
    %121 = vrot.lane.b32.xlu0 %v120, 104
    %v122 = vpop.permute.xlu0 %121
    %vm123 = vcmask 884544
    %124 = vst.msk [vmem:[#allocation0] ss:$8 sm:$0xf] %vm123, %v122
    %s125 = scalar_lea.vmem %s0, 25
    %v126 = vld [vmem:[%s125] sm:$0x1]
    %s127 = scalar_lea.vmem %s0, 56
    %v128 = vld [vmem:[%s127] sm:$0x2]
    %vm129 = vcmask 1041409
    %v130 = vsel %vm129, %v128, %v126
    %s131 = scalar_lea.vmem %s0, 87
    %v132 = vld [vmem:[%s131] sm:$0x4]
    %vm133 = vcmask 1042434
    %v134 = vsel %vm133, %v132, %v130
    %s135 = scalar_lea.vmem %s0, 118
    %v136 = vld [vmem:[%s135] sm:$0x8]
    %vm137 = vcmask 1043459
    %v138 = vsel %vm137, %v136, %v134
    %139 = vrot.lane.b32.xlu0 %v138, 100
    %v140 = vpop.permute.xlu0 %139
    %vm141 = vcmask 851744
    %142 = vst.msk [vmem:[#allocation0] ss:$8 sm:$0xf] %vm141, %v140
    %s143 = scalar_lea.vmem %s0, 24
    %v144 = vld [vmem:[%s143] sm:$0x1]
    %s145 = scalar_lea.vmem %s0, 55
    %v146 = vld [vmem:[%s145] sm:$0x2]
    %vm147 = vcmask 1041409
    %v148 = vsel %vm147, %v146, %v144
    %s149 = scalar_lea.vmem %s0, 86
    %v150 = vld [vmem:[%s149] sm:$0x4]
    %vm151 = vcmask 1042434
    %v152 = vsel %vm151, %v150, %v148
    %s153 = scalar_lea.vmem %s0, 117
    %v154 = vld [vmem:[%s153] sm:$0x8]
    %vm155 = vcmask 1043459
    %v156 = vsel %vm155, %v154, %v152
    %157 = vrot.lane.b32.xlu0 %v156, 96
    %v158 = vpop.permute.xlu0 %157
    %vm159 = vcmask 818944
    %160 = vst.msk [vmem:[#allocation0] ss:$8 sm:$0xf] %vm159, %v158
    %s161 = scalar_lea.vmem %s0, 23
    %v162 = vld [vmem:[%s161] sm:$0x1]
    %s163 = scalar_lea.vmem %s0, 54
    %v164 = vld [vmem:[%s163] sm:$0x2]
    %vm165 = vcmask 1041409
    %v166 = vsel %vm165, %v164, %v162
    %s167 = scalar_lea.vmem %s0, 85
    %v168 = vld [vmem:[%s167] sm:$0x4]
    %vm169 = vcmask 1042434
    %v170 = vsel %vm169, %v168, %v166
    %s171 = scalar_lea.vmem %s0, 116
    %v172 = vld [vmem:[%s171] sm:$0x8]
    %vm173 = vcmask 1043459
    %v174 = vsel %vm173, %v172, %v170
    %175 = vrot.lane.b32.xlu0 %v174, 92
    %v176 = vpop.permute.xlu0 %175
    %vm177 = vcmask 786144
    %178 = vst.msk [vmem:[#allocation0] ss:$8 sm:$0xf] %vm177, %v176
    %s179 = scalar_lea.vmem %s0, 22
    %v180 = vld [vmem:[%s179] sm:$0x1]
    %s181 = scalar_lea.vmem %s0, 53
    %v182 = vld [vmem:[%s181] sm:$0x2]
    %vm183 = vcmask 1041409
    %v184 = vsel %vm183, %v182, %v180
    %s185 = scalar_lea.vmem %s0, 84
    %v186 = vld [vmem:[%s185] sm:$0x4]
    %vm187 = vcmask 1042434
    %v188 = vsel %vm187, %v186, %v184
    %s189 = scalar_lea.vmem %s0, 115
    %v190 = vld [vmem:[%s189] sm:$0x8]
    %vm191 = vcmask 1043459
    %v192 = vsel %vm191, %v190, %v188
    %193 = vrot.lane.b32.xlu0 %v192, 88
    %v194 = vpop.permute.xlu0 %193
    %vm195 = vcmask 753344
    %196 = vst.msk [vmem:[#allocation0] ss:$8 sm:$0xf] %vm195, %v194
    %s197 = scalar_lea.vmem %s0, 21
    %v198 = vld [vmem:[%s197] sm:$0x1]
    %s199 = scalar_lea.vmem %s0, 52
    %v200 = vld [vmem:[%s199] sm:$0x2]
    %vm201 = vcmask 1041409
    %v202 = vsel %vm201, %v200, %v198
    %s203 = scalar_lea.vmem %s0, 83
    %v204 = vld [vmem:[%s203] sm:$0x4]
    %vm205 = vcmask 1042434
    %v206 = vsel %vm205, %v204, %v202
    %s207 = scalar_lea.vmem %s0, 114
    %v208 = vld [vmem:[%s207] sm:$0x8]
    %vm209 = vcmask 1043459
    %v210 = vsel %vm209, %v208, %v206
    %211 = vrot.lane.b32.xlu0 %v210, 84
    %v212 = vpop.permute.xlu0 %211
    %vm213 = vcmask 720544
    %214 = vst.msk [vmem:[#allocation0] ss:$8 sm:$0xf] %vm213, %v212
    %s215 = scalar_lea.vmem %s0, 20
    %v216 = vld [vmem:[%s215] sm:$0x1]
    %s217 = scalar_lea.vmem %s0, 51
    %v218 = vld [vmem:[%s217] sm:$0x2]
    %vm219 = vcmask 1041409
    %v220 = vsel %vm219, %v218, %v216
    %s221 = scalar_lea.vmem %s0, 82
    %v222 = vld [vmem:[%s221] sm:$0x4]
    %vm223 = vcmask 1042434
    %v224 = vsel %vm223, %v222, %v220
    %s225 = scalar_lea.vmem %s0, 113
    %v226 = vld [vmem:[%s225] sm:$0x8]
    %vm227 = vcmask 1043459
    %v228 = vsel %vm227, %v226, %v224
    %229 = vrot.lane.b32.xlu0 %v228, 80
    %v230 = vpop.permute.xlu0 %229
    %vm231 = vcmask 687744
    %232 = vst.msk [vmem:[#allocation0] ss:$8 sm:$0xf] %vm231, %v230
    %s233 = scalar_lea.vmem %s0, 19
    %v234 = vld [vmem:[%s233] sm:$0x1]
    %s235 = scalar_lea.vmem %s0, 50
    %v236 = vld [vmem:[%s235] sm:$0x2]
    %vm237 = vcmask 1041409
    %v238 = vsel %vm237, %v236, %v234
    %s239 = scalar_lea.vmem %s0, 81
    %v240 = vld [vmem:[%s239] sm:$0x4]
    %vm241 = vcmask 1042434
    %v242 = vsel %vm241, %v240, %v238
    %s243 = scalar_lea.vmem %s0, 112
    %v244 = vld [vmem:[%s243] sm:$0x8]
    %vm245 = vcmask 1043459
    %v246 = vsel %vm245, %v244, %v242
    %247 = vrot.lane.b32.xlu0 %v246, 76
    %v248 = vpop.permute.xlu0 %247
    %vm249 = vcmask 654944
    %250 = vst.msk [vmem:[#allocation0] ss:$8 sm:$0xf] %vm249, %v248
    %s251 = scalar_lea.vmem %s0, 18
    %v252 = vld [vmem:[%s251] sm:$0x1]
    %s253 = scalar_lea.vmem %s0, 49
    %v254 = vld [vmem:[%s253] sm:$0x2]
    %vm255 = vcmask 1041409
    %v256 = vsel %vm255, %v254, %v252
    %s257 = scalar_lea.vmem %s0, 80
    %v258 = vld [vmem:[%s257] sm:$0x4]
    %vm259 = vcmask 1042434
    %v260 = vsel %vm259, %v258, %v256
    %s261 = scalar_lea.vmem %s0, 111
    %v262 = vld [vmem:[%s261] sm:$0x8]
    %vm263 = vcmask 1043459
    %v264 = vsel %vm263, %v262, %v260
    %265 = vrot.lane.b32.xlu0 %v264, 72
    %v266 = vpop.permute.xlu0 %265
    %vm267 = vcmask 622144
    %268 = vst.msk [vmem:[#allocation0] ss:$8 sm:$0xf] %vm267, %v266
    %s269 = scalar_lea.vmem %s0, 17
    %v270 = vld [vmem:[%s269] sm:$0x1]
    %s271 = scalar_lea.vmem %s0, 48
    %v272 = vld [vmem:[%s271] sm:$0x2]
    %vm273 = vcmask 1041409
    %v274 = vsel %vm273, %v272, %v270
    %s275 = scalar_lea.vmem %s0, 79
    %v276 = vld [vmem:[%s275] sm:$0x4]
    %vm277 = vcmask 1042434
    %v278 = vsel %vm277, %v276, %v274
    %s279 = scalar_lea.vmem %s0, 110
    %v280 = vld [vmem:[%s279] sm:$0x8]
    %vm281 = vcmask 1043459
    %v282 = vsel %vm281, %v280, %v278
    %283 = vrot.lane.b32.xlu0 %v282, 68
    %v284 = vpop.permute.xlu0 %283
    %vm285 = vcmask 589344
    %286 = vst.msk [vmem:[#allocation0] ss:$8 sm:$0xf] %vm285, %v284
    %s287 = scalar_lea.vmem %s0, 16
    %v288 = vld [vmem:[%s287] sm:$0x1]
    %s289 = scalar_lea.vmem %s0, 47
    %v290 = vld [vmem:[%s289] sm:$0x2]
    %vm291 = vcmask 1041409
    %v292 = vsel %vm291, %v290, %v288
    %s293 = scalar_lea.vmem %s0, 78
    %v294 = vld [vmem:[%s293] sm:$0x4]
    %vm295 = vcmask 1042434
    %v296 = vsel %vm295, %v294, %v292
    %s297 = scalar_lea.vmem %s0, 109
    %v298 = vld [vmem:[%s297] sm:$0x8]
    %vm299 = vcmask 1043459
    %v300 = vsel %vm299, %v298, %v296
    %301 = vrot.lane.b32.xlu0 %v300, 64
    %v302 = vpop.permute.xlu0 %301
    %vm303 = vcmask 556544
    %304 = vst.msk [vmem:[#allocation0] ss:$8 sm:$0xf] %vm303, %v302
    %s305 = scalar_lea.vmem %s0, 15
    %v306 = vld [vmem:[%s305] sm:$0x1]
    %s307 = scalar_lea.vmem %s0, 46
    %v308 = vld [vmem:[%s307] sm:$0x2]
    %vm309 = vcmask 1041409
    %v310 = vsel %vm309, %v308, %v306
    %s311 = scalar_lea.vmem %s0, 77
    %v312 = vld [vmem:[%s311] sm:$0x4]
    %vm313 = vcmask 1042434
    %v314 = vsel %vm313, %v312, %v310
    %s315 = scalar_lea.vmem %s0, 108
    %v316 = vld [vmem:[%s315] sm:$0x8]
    %vm317 = vcmask 1043459
    %v318 = vsel %vm317, %v316, %v314
    %319 = vrot.lane.b32.xlu0 %v318, 60
    %v320 = vpop.permute.xlu0 %319
    %vm321 = vcmask 523744
    %322 = vst.msk [vmem:[#allocation0] ss:$8 sm:$0xf] %vm321, %v320
    %s323 = scalar_lea.vmem %s0, 14
    %v324 = vld [vmem:[%s323] sm:$0x1]
    %s325 = scalar_lea.vmem %s0, 45
    %v326 = vld [vmem:[%s325] sm:$0x2]
    %vm327 = vcmask 1041409
    %v328 = vsel %vm327, %v326, %v324
    %s329 = scalar_lea.vmem %s0, 76
    %v330 = vld [vmem:[%s329] sm:$0x4]
    %vm331 = vcmask 1042434
    %v332 = vsel %vm331, %v330, %v328
    %s333 = scalar_lea.vmem %s0, 107
    %v334 = vld [vmem:[%s333] sm:$0x8]
    %vm335 = vcmask 1043459
    %v336 = vsel %vm335, %v334, %v332
    %337 = vrot.lane.b32.xlu0 %v336, 56
    %v338 = vpop.permute.xlu0 %337
    %vm339 = vcmask 490944
    %340 = vst.msk [vmem:[#allocation0] ss:$8 sm:$0xf] %vm339, %v338
    %s341 = scalar_lea.vmem %s0, 13
    %v342 = vld [vmem:[%s341] sm:$0x1]
    %s343 = scalar_lea.vmem %s0, 44
    %v344 = vld [vmem:[%s343] sm:$0x2]
    %vm345 = vcmask 1041409
    %v346 = vsel %vm345, %v344, %v342
    %s347 = scalar_lea.vmem %s0, 75
    %v348 = vld [vmem:[%s347] sm:$0x4]
    %vm349 = vcmask 1042434
    %v350 = vsel %vm349, %v348, %v346
    %s351 = scalar_lea.vmem %s0, 106
    %v352 = vld [vmem:[%s351] sm:$0x8]
    %vm353 = vcmask 1043459
    %v354 = vsel %vm353, %v352, %v350
    %355 = vrot.lane.b32.xlu0 %v354, 52
    %v356 = vpop.permute.xlu0 %355
    %vm357 = vcmask 458144
    %358 = vst.msk [vmem:[#allocation0] ss:$8 sm:$0xf] %vm357, %v356
    %s359 = scalar_lea.vmem %s0, 12
    %v360 = vld [vmem:[%s359] sm:$0x1]
    %s361 = scalar_lea.vmem %s0, 43
    %v362 = vld [vmem:[%s361] sm:$0x2]
    %vm363 = vcmask 1041409
    %v364 = vsel %vm363, %v362, %v360
    %s365 = scalar_lea.vmem %s0, 74
    %v366 = vld [vmem:[%s365] sm:$0x4]
    %vm367 = vcmask 1042434
    %v368 = vsel %vm367, %v366, %v364
    %s369 = scalar_lea.vmem %s0, 105
    %v370 = vld [vmem:[%s369] sm:$0x8]
    %vm371 = vcmask 1043459
    %v372 = vsel %vm371, %v370, %v368
    %373 = vrot.lane.b32.xlu0 %v372, 48
    %v374 = vpop.permute.xlu0 %373
    %vm375 = vcmask 425344
    %376 = vst.msk [vmem:[#allocation0] ss:$8 sm:$0xf] %vm375, %v374
    %s377 = scalar_lea.vmem %s0, 11
    %v378 = vld [vmem:[%s377] sm:$0x1]
    %s379 = scalar_lea.vmem %s0, 42
    %v380 = vld [vmem:[%s379] sm:$0x2]
    %vm381 = vcmask 1041409
    %v382 = vsel %vm381, %v380, %v378
    %s383 = scalar_lea.vmem %s0, 73
    %v384 = vld [vmem:[%s383] sm:$0x4]
    %vm385 = vcmask 1042434
    %v386 = vsel %vm385, %v384, %v382
    %s387 = scalar_lea.vmem %s0, 104
    %v388 = vld [vmem:[%s387] sm:$0x8]
    %vm389 = vcmask 1043459
    %v390 = vsel %vm389, %v388, %v386
    %391 = vrot.lane.b32.xlu0 %v390, 44
    %v392 = vpop.permute.xlu0 %391
    %vm393 = vcmask 392544
    %394 = vst.msk [vmem:[#allocation0] ss:$8 sm:$0xf] %vm393, %v392
    %s395 = scalar_lea.vmem %s0, 10
    %v396 = vld [vmem:[%s395] sm:$0x1]
    %s397 = scalar_lea.vmem %s0, 41
    %v398 = vld [vmem:[%s397] sm:$0x2]
    %vm399 = vcmask 1041409
    %v400 = vsel %vm399, %v398, %v396
    %s401 = scalar_lea.vmem %s0, 72
    %v402 = vld [vmem:[%s401] sm:$0x4]
    %vm403 = vcmask 1042434
    %v404 = vsel %vm403, %v402, %v400
    %s405 = scalar_lea.vmem %s0, 103
    %v406 = vld [vmem:[%s405] sm:$0x8]
    %vm407 = vcmask 1043459
    %v408 = vsel %vm407, %v406, %v404
    %409 = vrot.lane.b32.xlu0 %v408, 40
    %v410 = vpop.permute.xlu0 %409
    %vm411 = vcmask 359744
    %412 = vst.msk [vmem:[#allocation0] ss:$8 sm:$0xf] %vm411, %v410
    %s413 = scalar_lea.vmem %s0, 9
    %v414 = vld [vmem:[%s413] sm:$0x1]
    %s415 = scalar_lea.vmem %s0, 40
    %v416 = vld [vmem:[%s415] sm:$0x2]
    %vm417 = vcmask 1041409
    %v418 = vsel %vm417, %v416, %v414
    %s419 = scalar_lea.vmem %s0, 71
    %v420 = vld [vmem:[%s419] sm:$0x4]
    %vm421 = vcmask 1042434
    %v422 = vsel %vm421, %v420, %v418
    %s423 = scalar_lea.vmem %s0, 102
    %v424 = vld [vmem:[%s423] sm:$0x8]
    %vm425 = vcmask 1043459
    %v426 = vsel %vm425, %v424, %v422
    %427 = vrot.lane.b32.xlu0 %v426, 36
    %v428 = vpop.permute.xlu0 %427
    %vm429 = vcmask 326944
    %430 = vst.msk [vmem:[#allocation0] ss:$8 sm:$0xf] %vm429, %v428
    %s431 = scalar_lea.vmem %s0, 8
    %v432 = vld [vmem:[%s431] sm:$0x1]
    %s433 = scalar_lea.vmem %s0, 39
    %v434 = vld [vmem:[%s433] sm:$0x2]
    %vm435 = vcmask 1041409
    %v436 = vsel %vm435, %v434, %v432
    %s437 = scalar_lea.vmem %s0, 70
    %v438 = vld [vmem:[%s437] sm:$0x4]
    %vm439 = vcmask 1042434
    %v440 = vsel %vm439, %v438, %v436
    %s441 = scalar_lea.vmem %s0, 101
    %v442 = vld [vmem:[%s441] sm:$0x8]
    %vm443 = vcmask 1043459
    %v444 = vsel %vm443, %v442, %v440
    %445 = vrot.lane.b32.xlu0 %v444, 32
    %v446 = vpop.permute.xlu0 %445
    %vm447 = vcmask 294144
    %448 = vst.msk [vmem:[#allocation0] ss:$8 sm:$0xf] %vm447, %v446
    %s449 = scalar_lea.vmem %s0, 7
    %v450 = vld [vmem:[%s449] sm:$0x1]
    %s451 = scalar_lea.vmem %s0, 38
    %v452 = vld [vmem:[%s451] sm:$0x2]
    %vm453 = vcmask 1041409
    %v454 = vsel %vm453, %v452, %v450
    %s455 = scalar_lea.vmem %s0, 69
    %v456 = vld [vmem:[%s455] sm:$0x4]
    %vm457 = vcmask 1042434
    %v458 = vsel %vm457, %v456, %v454
    %s459 = scalar_lea.vmem %s0, 100
    %v460 = vld [vmem:[%s459] sm:$0x8]
    %vm461 = vcmask 1043459
    %v462 = vsel %vm461, %v460, %v458
    %463 = vrot.lane.b32.xlu0 %v462, 28
    %v464 = vpop.permute.xlu0 %463
    %vm465 = vcmask 261344
    %466 = vst.msk [vmem:[#allocation0] ss:$8 sm:$0xf] %vm465, %v464
    %s467 = scalar_lea.vmem %s0, 6
    %v468 = vld [vmem:[%s467] sm:$0x1]
    %s469 = scalar_lea.vmem %s0, 37
    %v470 = vld [vmem:[%s469] sm:$0x2]
    %vm471 = vcmask 1041409
    %v472 = vsel %vm471, %v470, %v468
    %s473 = scalar_lea.vmem %s0, 68
    %v474 = vld [vmem:[%s473] sm:$0x4]
    %vm475 = vcmask 1042434
    %v476 = vsel %vm475, %v474, %v472
    %s477 = scalar_lea.vmem %s0, 99
    %v478 = vld [vmem:[%s477] sm:$0x8]
    %vm479 = vcmask 1043459
    %v480 = vsel %vm479, %v478, %v476
    %481 = vrot.lane.b32.xlu0 %v480, 24
    %v482 = vpop.permute.xlu0 %481
    %vm483 = vcmask 228544
    %484 = vst.msk [vmem:[#allocation0] ss:$8 sm:$0xf] %vm483, %v482
    %s485 = scalar_lea.vmem %s0, 5
    %v486 = vld [vmem:[%s485] sm:$0x1]
    %s487 = scalar_lea.vmem %s0, 36
    %v488 = vld [vmem:[%s487] sm:$0x2]
    %vm489 = vcmask 1041409
    %v490 = vsel %vm489, %v488, %v486
    %s491 = scalar_lea.vmem %s0, 67
    %v492 = vld [vmem:[%s491] sm:$0x4]
    %vm493 = vcmask 1042434
    %v494 = vsel %vm493, %v492, %v490
    %s495 = scalar_lea.vmem %s0, 98
    %v496 = vld [vmem:[%s495] sm:$0x8]
    %vm497 = vcmask 1043459
    %v498 = vsel %vm497, %v496, %v494
    %499 = vrot.lane.b32.xlu0 %v498, 20
    %v500 = vpop.permute.xlu0 %499
    %vm501 = vcmask 195744
    %502 = vst.msk [vmem:[#allocation0] ss:$8 sm:$0xf] %vm501, %v500
    %s503 = scalar_lea.vmem %s0, 4
    %v504 = vld [vmem:[%s503] sm:$0x1]
    %s505 = scalar_lea.vmem %s0, 35
    %v506 = vld [vmem:[%s505] sm:$0x2]
    %vm507 = vcmask 1041409
    %v508 = vsel %vm507, %v506, %v504
    %s509 = scalar_lea.vmem %s0, 66
    %v510 = vld [vmem:[%s509] sm:$0x4]
    %vm511 = vcmask 1042434
    %v512 = vsel %vm511, %v510, %v508
    %s513 = scalar_lea.vmem %s0, 97
    %v514 = vld [vmem:[%s513] sm:$0x8]
    %vm515 = vcmask 1043459
    %v516 = vsel %vm515, %v514, %v512
    %517 = vrot.lane.b32.xlu0 %v516, 16
    %v518 = vpop.permute.xlu0 %517
    %vm519 = vcmask 162944
    %520 = vst.msk [vmem:[#allocation0] ss:$8 sm:$0xf] %vm519, %v518
    %s521 = scalar_lea.vmem %s0, 3
    %v522 = vld [vmem:[%s521] sm:$0x1]
    %s523 = scalar_lea.vmem %s0, 34
    %v524 = vld [vmem:[%s523] sm:$0x2]
    %vm525 = vcmask 1041409
    %v526 = vsel %vm525, %v524, %v522
    %s527 = scalar_lea.vmem %s0, 65
    %v528 = vld [vmem:[%s527] sm:$0x4]
    %vm529 = vcmask 1042434
    %v530 = vsel %vm529, %v528, %v526
    %s531 = scalar_lea.vmem %s0, 96
    %v532 = vld [vmem:[%s531] sm:$0x8]
    %vm533 = vcmask 1043459
    %v534 = vsel %vm533, %v532, %v530
    %535 = vrot.lane.b32.xlu0 %v534, 12
    %v536 = vpop.permute.xlu0 %535
    %vm537 = vcmask 130144
    %538 = vst.msk [vmem:[#allocation0] ss:$8 sm:$0xf] %vm537, %v536
    %s539 = scalar_lea.vmem %s0, 2
    %v540 = vld [vmem:[%s539] sm:$0x1]
    %s541 = scalar_lea.vmem %s0, 33
    %v542 = vld [vmem:[%s541] sm:$0x2]
    %vm543 = vcmask 1041409
    %v544 = vsel %vm543, %v542, %v540
    %s545 = scalar_lea.vmem %s0, 64
    %v546 = vld [vmem:[%s545] sm:$0x4]
    %vm547 = vcmask 1042434
    %v548 = vsel %vm547, %v546, %v544
    %s549 = scalar_lea.vmem %s0, 95
    %v550 = vld [vmem:[%s549] sm:$0x8]
    %vm551 = vcmask 1043459
    %v552 = vsel %vm551, %v550, %v548
    %553 = vrot.lane.b32.xlu0 %v552, 8
    %v554 = vpop.permute.xlu0 %553
    %vm555 = vcmask 97344
    %556 = vst.msk [vmem:[#allocation0] ss:$8 sm:$0xf] %vm555, %v554
    %s557 = scalar_lea.vmem %s0, 1
    %v558 = vld [vmem:[%s557] sm:$0x1]
    %s559 = scalar_lea.vmem %s0, 32
    %v560 = vld [vmem:[%s559] sm:$0x2]
    %vm561 = vcmask 1041409
    %v562 = vsel %vm561, %v560, %v558
    %s563 = scalar_lea.vmem %s0, 63
    %v564 = vld [vmem:[%s563] sm:$0x4]
    %vm565 = vcmask 1042434
    %v566 = vsel %vm565, %v564, %v562
    %s567 = scalar_lea.vmem %s0, 94
    %v568 = vld [vmem:[%s567] sm:$0x8]
    %vm569 = vcmask 1043459
    %v570 = vsel %vm569, %v568, %v566
    %571 = vrot.lane.b32.xlu0 %v570, 4
    %v572 = vpop.permute.xlu0 %571
    %vm573 = vcmask 64544
    %574 = vst.msk [vmem:[#allocation0] ss:$8 sm:$0xf] %vm573, %v572
    %s576 = sshllo.u32 0, 1
    %v578 = vld [vmem:[#allocation0] sm:%s576]
    %s579 = sshllo.u32 0, 1
    %580 = vst [vmem:[%s1] sm:%s579] %v578
    %s581 = scalar_lea.vmem [#allocation0], 8
    %v582 = vld [vmem:[%s581] sm:%s576]
    %s583 = sshllo.u32 0, 1
    %s584 = scalar_lea.vmem %s1, 1
    %585 = vst [vmem:[%s584] sm:%s583] %v582
    %s586 = scalar_lea.vmem [#allocation0], 16
    %v587 = vld [vmem:[%s586] sm:%s576]
    %s588 = sshllo.u32 0, 1
    %s589 = smul.addr 1, 2
    %s590 = scalar_lea.vmem %s1, %s589
    %591 = vst [vmem:[%s590] sm:%s588] %v587
    %s592 = scalar_lea.vmem [#allocation0], 24
    %v593 = vld [vmem:[%s592] sm:%s576]
    %s594 = sshllo.u32 0, 1
    %s595 = smul.addr 1, 3
    %s596 = scalar_lea.vmem %s1, %s595
    %597 = vst [vmem:[%s596] sm:%s594] %v593

// kernel: linear_hardsigmoid.1
$region0: #{linear_hardsigmoid.1}
  #allocation0 [shape = 'u32[]', space=smem, size = 0x4, offset = 0x4, fixed_abs, tag = 'smem constant byte address 0x4 - core index']
  #allocation1 [shape = 'u32[144,128]{1,0:T(1,128)}', space=vmem, size = 0x12000, scoped, tag = 'internal scratch']
  %s0 = inlined_call_operand.vmem [shape: f32[8,384], index: 0, kind: input, shape index: {}]
  %s1 = inlined_call_operand.vmem [shape: f32[384,512], index: 1, kind: input, shape index: {}]
  %s2 = inlined_call_operand.vmem [shape: f32[1,512], index: 2, kind: input, shape index: {}]
  %s3 = inlined_call_operand.vmem [shape: f32[8,512], index: 3, kind: output, shape index: {}]
  %s4 = sld [smem:[#allocation0]]
  $region22: #{linear_hardsigmoid.1} parent=0
    _
  %s6 = ssub.s32 1, %s4
  %s7 = scalar_select 0, %s6, %s4
  // Predicated region
  $region2: #{linear_hardsigmoid.1} parent=0 // pred_check
    _
  $region3: #{linear_hardsigmoid.1} parent=0 // pred_check_branch
    %9 = sbr.rel (0) target = $region5
  $region4: #{linear_hardsigmoid.1} parent=0 // pred_region
    _
  $region5: #{linear_hardsigmoid.1} parent=0 // pred_fallthru
    _
  // Predicated region
  $region6: #{linear_hardsigmoid.1} parent=0 // pred_check
    _
  $region7: #{linear_hardsigmoid.1} parent=0 // pred_check_branch
    %11 = sbr.rel (0) target = $region9
  $region8: #{linear_hardsigmoid.1} parent=0 // pred_region
    _
  $region9: #{linear_hardsigmoid.1} parent=0 // pred_fallthru
    _
  // Predicated region
  $region10: #{linear_hardsigmoid.1} parent=0 // pred_check
    _
  $region11: #{linear_hardsigmoid.1} parent=0 // pred_check_branch
    %13 = sbr.rel (0) target = $region13
  $region12: #{linear_hardsigmoid.1} parent=0 // pred_region
    _
  $region13: #{linear_hardsigmoid.1} parent=0 // pred_fallthru
    _
  %v14 = vld [vmem:[%s0] sm:$0xff]
  %v15 = vld [vmem:[%s0 + $0x8] sm:$0xff]
  %v16 = vld [vmem:[%s0 + $0x10] sm:$0xff]
  %v17 = vld [vmem:[%s1] sm:$0xff]
  %v18 = vld [vmem:[%s1 + $0x8] sm:$0xff]
  %v19 = vld [vmem:[%s1 + $0x10] sm:$0xff]
  %v20 = vld [vmem:[%s1 + $0x18] sm:$0xff]
  %v21 = vld [vmem:[%s1 + $0x20] sm:$0xff]
  %v22 = vld [vmem:[%s1 + $0x28] sm:$0xff]
  %v23 = vld [vmem:[%s1 + $0x30] sm:$0xff]
  %v24 = vld [vmem:[%s1 + $0x38] sm:$0xff]
  %v25 = vld [vmem:[%s1 + $0x40] sm:$0xff]
  %v26 = vld [vmem:[%s1 + $0x48] sm:$0xff]
  %v27 = vld [vmem:[%s1 + $0x50] sm:$0xff]
  %v28 = vld [vmem:[%s1 + $0x58] sm:$0xff]
  %v29 = vld [vmem:[%s1 + $0x60] sm:$0xff]
  %v30 = vld [vmem:[%s1 + $0x68] sm:$0xff]
  %v31 = vld [vmem:[%s1 + $0x70] sm:$0xff]
  %v32 = vld [vmem:[%s1 + $0x78] sm:$0xff]
  %v33 = vld [vmem:[%s1 + $0x80] sm:$0xff]
  %v34 = vld [vmem:[%s1 + $0x88] sm:$0xff]
  %v35 = vld [vmem:[%s1 + $0x90] sm:$0xff]
  %v36 = vld [vmem:[%s1 + $0x98] sm:$0xff]
  %v37 = vld [vmem:[%s1 + $0xa0] sm:$0xff]
  %v38 = vld [vmem:[%s1 + $0xa8] sm:$0xff]
  %v39 = vld [vmem:[%s1 + $0xb0] sm:$0xff]
  %v40 = vld [vmem:[%s1 + $0xb8] sm:$0xff]
  %v41 = vld [vmem:[%s1 + $0xc0] sm:$0xff]
  %v42 = vld [vmem:[%s1 + $0xc8] sm:$0xff]
  %v43 = vld [vmem:[%s1 + $0xd0] sm:$0xff]
  %v44 = vld [vmem:[%s1 + $0xd8] sm:$0xff]
  %v45 = vld [vmem:[%s1 + $0xe0] sm:$0xff]
  %v46 = vld [vmem:[%s1 + $0xe8] sm:$0xff]
  %v47 = vld [vmem:[%s1 + $0xf0] sm:$0xff]
  %v48 = vld [vmem:[%s1 + $0xf8] sm:$0xff]
  %v49 = vld [vmem:[%s1 + $0x100] sm:$0xff]
  %v50 = vld [vmem:[%s1 + $0x108] sm:$0xff]
  %v51 = vld [vmem:[%s1 + $0x110] sm:$0xff]
  %v52 = vld [vmem:[%s1 + $0x118] sm:$0xff]
  %v53 = vld [vmem:[%s1 + $0x120] sm:$0xff]
  %v54 = vld [vmem:[%s1 + $0x128] sm:$0xff]
  %v55 = vld [vmem:[%s1 + $0x130] sm:$0xff]
  %v56 = vld [vmem:[%s1 + $0x138] sm:$0xff]
  %v57 = vld [vmem:[%s1 + $0x140] sm:$0xff]
  %v58 = vld [vmem:[%s1 + $0x148] sm:$0xff]
  %v59 = vld [vmem:[%s1 + $0x150] sm:$0xff]
  %v60 = vld [vmem:[%s1 + $0x158] sm:$0xff]
  %v61 = vld [vmem:[%s1 + $0x160] sm:$0xff]
  %v62 = vld [vmem:[%s1 + $0x168] sm:$0xff]
  %v63 = vld [vmem:[%s1 + $0x170] sm:$0xff]
  %v64 = vld [vmem:[%s1 + $0x178] sm:$0xff]
  %v65 = vld [vmem:[%s1 + $0x180] sm:$0xff]
  %v66 = vld [vmem:[%s1 + $0x188] sm:$0xff]
  %v67 = vld [vmem:[%s1 + $0x190] sm:$0xff]
  %v68 = vld [vmem:[%s1 + $0x198] sm:$0xff]
  %v69 = vld [vmem:[%s1 + $0x1a0] sm:$0xff]
  %v70 = vld [vmem:[%s1 + $0x1a8] sm:$0xff]
  %v71 = vld [vmem:[%s1 + $0x1b0] sm:$0xff]
  %v72 = vld [vmem:[%s1 + $0x1b8] sm:$0xff]
  %v73 = vld [vmem:[%s1 + $0x1c0] sm:$0xff]
  %v74 = vld [vmem:[%s1 + $0x1c8] sm:$0xff]
  %v75 = vld [vmem:[%s1 + $0x1d0] sm:$0xff]
  %v76 = vld [vmem:[%s1 + $0x1d8] sm:$0xff]
  %v77 = vld [vmem:[%s1 + $0x1e0] sm:$0xff]
  %v78 = vld [vmem:[%s1 + $0x1e8] sm:$0xff]
  %v79 = vld [vmem:[%s1 + $0x1f0] sm:$0xff]
  %v80 = vld [vmem:[%s1 + $0x1f8] sm:$0xff]
  %v81 = vld [vmem:[%s1 + $0x200] sm:$0xff]
  %v82 = vld [vmem:[%s1 + $0x208] sm:$0xff]
  %v83 = vld [vmem:[%s1 + $0x210] sm:$0xff]
  %v84 = vld [vmem:[%s1 + $0x218] sm:$0xff]
  %v85 = vld [vmem:[%s1 + $0x220] sm:$0xff]
  %v86 = vld [vmem:[%s1 + $0x228] sm:$0xff]
  %v87 = vld [vmem:[%s1 + $0x230] sm:$0xff]
  %v88 = vld [vmem:[%s1 + $0x238] sm:$0xff]
  %v89 = vld [vmem:[%s1 + $0x240] sm:$0xff]
  %v90 = vld [vmem:[%s1 + $0x248] sm:$0xff]
  %v91 = vld [vmem:[%s1 + $0x250] sm:$0xff]
  %v92 = vld [vmem:[%s1 + $0x258] sm:$0xff]
  %v93 = vld [vmem:[%s1 + $0x260] sm:$0xff]
  %v94 = vld [vmem:[%s1 + $0x268] sm:$0xff]
  %v95 = vld [vmem:[%s1 + $0x270] sm:$0xff]
  %v96 = vld [vmem:[%s1 + $0x278] sm:$0xff]
  %v97 = vld [vmem:[%s1 + $0x280] sm:$0xff]
  %v98 = vld [vmem:[%s1 + $0x288] sm:$0xff]
  %v99 = vld [vmem:[%s1 + $0x290] sm:$0xff]
  %v100 = vld [vmem:[%s1 + $0x298] sm:$0xff]
  %v101 = vld [vmem:[%s1 + $0x2a0] sm:$0xff]
  %v102 = vld [vmem:[%s1 + $0x2a8] sm:$0xff]
  %v103 = vld [vmem:[%s1 + $0x2b0] sm:$0xff]
  %v104 = vld [vmem:[%s1 + $0x2b8] sm:$0xff]
  %v105 = vld [vmem:[%s1 + $0x2c0] sm:$0xff]
  %v106 = vld [vmem:[%s1 + $0x2c8] sm:$0xff]
  %v107 = vld [vmem:[%s1 + $0x2d0] sm:$0xff]
  %v108 = vld [vmem:[%s1 + $0x2d8] sm:$0xff]
  %v109 = vld [vmem:[%s1 + $0x2e0] sm:$0xff]
  %v110 = vld [vmem:[%s1 + $0x2e8] sm:$0xff]
  %v111 = vld [vmem:[%s1 + $0x2f0] sm:$0xff]
  %v112 = vld [vmem:[%s1 + $0x2f8] sm:$0xff]
  %v113 = vld [vmem:[%s1 + $0x300] sm:$0xff]
  %v114 = vld [vmem:[%s1 + $0x308] sm:$0xff]
  %v115 = vld [vmem:[%s1 + $0x310] sm:$0xff]
  %v116 = vld [vmem:[%s1 + $0x318] sm:$0xff]
  %v117 = vld [vmem:[%s1 + $0x320] sm:$0xff]
  %v118 = vld [vmem:[%s1 + $0x328] sm:$0xff]
  %v119 = vld [vmem:[%s1 + $0x330] sm:$0xff]
  %v120 = vld [vmem:[%s1 + $0x338] sm:$0xff]
  %v121 = vld [vmem:[%s1 + $0x340] sm:$0xff]
  %v122 = vld [vmem:[%s1 + $0x348] sm:$0xff]
  %v123 = vld [vmem:[%s1 + $0x350] sm:$0xff]
  %v124 = vld [vmem:[%s1 + $0x358] sm:$0xff]
  %v125 = vld [vmem:[%s1 + $0x360] sm:$0xff]
  %v126 = vld [vmem:[%s1 + $0x368] sm:$0xff]
  %v127 = vld [vmem:[%s1 + $0x370] sm:$0xff]
  %v128 = vld [vmem:[%s1 + $0x378] sm:$0xff]
  %v129 = vld [vmem:[%s1 + $0x380] sm:$0xff]
  %v130 = vld [vmem:[%s1 + $0x388] sm:$0xff]
  %v131 = vld [vmem:[%s1 + $0x390] sm:$0xff]
  %v132 = vld [vmem:[%s1 + $0x398] sm:$0xff]
  %v133 = vld [vmem:[%s1 + $0x3a0] sm:$0xff]
  %v134 = vld [vmem:[%s1 + $0x3a8] sm:$0xff]
  %v135 = vld [vmem:[%s1 + $0x3b0] sm:$0xff]
  %v136 = vld [vmem:[%s1 + $0x3b8] sm:$0xff]
  %v137 = vld [vmem:[%s1 + $0x3c0] sm:$0xff]
  %v138 = vld [vmem:[%s1 + $0x3c8] sm:$0xff]
  %v139 = vld [vmem:[%s1 + $0x3d0] sm:$0xff]
  %v140 = vld [vmem:[%s1 + $0x3d8] sm:$0xff]
  %v141 = vld [vmem:[%s1 + $0x3e0] sm:$0xff]
  %v142 = vld [vmem:[%s1 + $0x3e8] sm:$0xff]
  %v143 = vld [vmem:[%s1 + $0x3f0] sm:$0xff]
  %v144 = vld [vmem:[%s1 + $0x3f8] sm:$0xff]
  %v145 = vld [vmem:[%s1 + $0x400] sm:$0xff]
  %v146 = vld [vmem:[%s1 + $0x408] sm:$0xff]
  %v147 = vld [vmem:[%s1 + $0x410] sm:$0xff]
  %v148 = vld [vmem:[%s1 + $0x418] sm:$0xff]
  %v149 = vld [vmem:[%s1 + $0x420] sm:$0xff]
  %v150 = vld [vmem:[%s1 + $0x428] sm:$0xff]
  %v151 = vld [vmem:[%s1 + $0x430] sm:$0xff]
  %v152 = vld [vmem:[%s1 + $0x438] sm:$0xff]
  %v153 = vld [vmem:[%s1 + $0x440] sm:$0xff]
  %v154 = vld [vmem:[%s1 + $0x448] sm:$0xff]
  %v155 = vld [vmem:[%s1 + $0x450] sm:$0xff]
  %v156 = vld [vmem:[%s1 + $0x458] sm:$0xff]
  %v157 = vld [vmem:[%s1 + $0x460] sm:$0xff]
  %v158 = vld [vmem:[%s1 + $0x468] sm:$0xff]
  %v159 = vld [vmem:[%s1 + $0x470] sm:$0xff]
  %v160 = vld [vmem:[%s1 + $0x478] sm:$0xff]
  %v161 = vld [vmem:[%s1 + $0x480] sm:$0xff]
  %v162 = vld [vmem:[%s1 + $0x488] sm:$0xff]
  %v163 = vld [vmem:[%s1 + $0x490] sm:$0xff]
  %v164 = vld [vmem:[%s1 + $0x498] sm:$0xff]
  %v165 = vld [vmem:[%s1 + $0x4a0] sm:$0xff]
  %v166 = vld [vmem:[%s1 + $0x4a8] sm:$0xff]
  %v167 = vld [vmem:[%s1 + $0x4b0] sm:$0xff]
  %v168 = vld [vmem:[%s1 + $0x4b8] sm:$0xff]
  %v169 = vld [vmem:[%s1 + $0x4c0] sm:$0xff]
  %v170 = vld [vmem:[%s1 + $0x4c8] sm:$0xff]
  %v171 = vld [vmem:[%s1 + $0x4d0] sm:$0xff]
  %v172 = vld [vmem:[%s1 + $0x4d8] sm:$0xff]
  %v173 = vld [vmem:[%s1 + $0x4e0] sm:$0xff]
  %v174 = vld [vmem:[%s1 + $0x4e8] sm:$0xff]
  %v175 = vld [vmem:[%s1 + $0x4f0] sm:$0xff]
  %v176 = vld [vmem:[%s1 + $0x4f8] sm:$0xff]
  %v177 = vld [vmem:[%s1 + $0x500] sm:$0xff]
  %v178 = vld [vmem:[%s1 + $0x508] sm:$0xff]
  %v179 = vld [vmem:[%s1 + $0x510] sm:$0xff]
  %v180 = vld [vmem:[%s1 + $0x518] sm:$0xff]
  %v181 = vld [vmem:[%s1 + $0x520] sm:$0xff]
  %v182 = vld [vmem:[%s1 + $0x528] sm:$0xff]
  %v183 = vld [vmem:[%s1 + $0x530] sm:$0xff]
  %v184 = vld [vmem:[%s1 + $0x538] sm:$0xff]
  %v185 = vld [vmem:[%s1 + $0x540] sm:$0xff]
  %v186 = vld [vmem:[%s1 + $0x548] sm:$0xff]
  %v187 = vld [vmem:[%s1 + $0x550] sm:$0xff]
  %v188 = vld [vmem:[%s1 + $0x558] sm:$0xff]
  %v189 = vld [vmem:[%s1 + $0x560] sm:$0xff]
  %v190 = vld [vmem:[%s1 + $0x568] sm:$0xff]
  %v191 = vld [vmem:[%s1 + $0x570] sm:$0xff]
  %v192 = vld [vmem:[%s1 + $0x578] sm:$0xff]
  %v193 = vld [vmem:[%s1 + $0x580] sm:$0xff]
  %v194 = vld [vmem:[%s1 + $0x588] sm:$0xff]
  %v195 = vld [vmem:[%s1 + $0x590] sm:$0xff]
  %v196 = vld [vmem:[%s1 + $0x598] sm:$0xff]
  %v197 = vld [vmem:[%s1 + $0x5a0] sm:$0xff]
  %v198 = vld [vmem:[%s1 + $0x5a8] sm:$0xff]
  %v199 = vld [vmem:[%s1 + $0x5b0] sm:$0xff]
  %v200 = vld [vmem:[%s1 + $0x5b8] sm:$0xff]
  %v201 = vld [vmem:[%s1 + $0x5c0] sm:$0xff]
  %v202 = vld [vmem:[%s1 + $0x5c8] sm:$0xff]
  %v203 = vld [vmem:[%s1 + $0x5d0] sm:$0xff]
  %v204 = vld [vmem:[%s1 + $0x5d8] sm:$0xff]
  %v205 = vld [vmem:[%s1 + $0x5e0] sm:$0xff]
  %v206 = vld [vmem:[%s1 + $0x5e8] sm:$0xff]
  %v207 = vld [vmem:[%s1 + $0x5f0] sm:$0xff]
  %v208 = vld [vmem:[%s1 + $0x5f8] sm:$0xff]
  %v209 = vld [vmem:[%s2] sm:$0xf]
  %v211 = vlaneseq
  %v212 = vshrl.u32 %v211, 7
  %v213 = vsub.s32 0, %v212
  %v214 = vrot.slane %v209, %v213
  %v215 = vlaneseq
  %v216 = vshrl.u32 %v215, 7
  %v217 = vsub.s32 1, %v216
  %v218 = vrot.slane %v209, %v217
  %v219 = vlaneseq
  %v220 = vshrl.u32 %v219, 7
  %v221 = vsub.s32 2, %v220
  %v222 = vrot.slane %v209, %v221
  %v223 = vlaneseq
  %v224 = vshrl.u32 %v223, 7
  %v225 = vsub.s32 3, %v224
  %v226 = vrot.slane %v209, %v225
  %231 = vmatprep.subr.mxu0 %v18
  %232 = vmatpush1.msra.mxu0 %v17
  %233 = vmatprep.subr.mxu0 %v22
  %234 = vmatpush1.msra.mxu0 %v21
  %235 = vmatprep.subr.mxu0 %v26
  %236 = vmatpush1.msra.mxu0 %v25
  %237 = vmatprep.subr.mxu0 %v30
  %238 = vmatpush1.msra.mxu0 %v29
  %239 = vmatprep.subr.mxu0 %v34
  %240 = vmatpush1.msra.mxu0 %v33
  %241 = vmatprep.subr.mxu0 %v38
  %242 = vmatpush1.msra.mxu0 %v37
  %243 = vmatprep.subr.mxu0 %v42
  %244 = vmatpush1.msra.mxu0 %v41
  %245 = vmatprep.subr.mxu0 %v46
  %246 = vmatpush1.msra.mxu0 %v45
  %247 = vmatprep.subr.mxu0 %v50
  %248 = vmatpush1.msra.mxu0 %v49
  %249 = vmatprep.subr.mxu0 %v54
  %250 = vmatpush1.msra.mxu0 %v53
  %251 = vmatprep.subr.mxu0 %v58
  %252 = vmatpush1.msra.mxu0 %v57
  %253 = vmatprep.subr.mxu0 %v62
  %254 = vmatpush1.msra.mxu0 %v61
  %255 = vmatprep.subr.mxu0 %v66
  %256 = vmatpush1.msra.mxu0 %v65
  %257 = vmatprep.subr.mxu0 %v70
  %258 = vmatpush1.msra.mxu0 %v69
  %259 = vmatprep.subr.mxu0 %v74
  %260 = vmatpush1.msra.mxu0 %v73
  %261 = vmatprep.subr.mxu0 %v78
  %262 = vmatpush1.msra.mxu0 %v77
  %263 = vmatprep.subr.mxu0 %v82
  %264 = vmatpush1.msra.mxu0 %v81
  %265 = vmatprep.subr.mxu0 %v86
  %266 = vmatpush1.msra.mxu0 %v85
  %267 = vmatprep.subr.mxu0 %v90
  %268 = vmatpush1.msra.mxu0 %v89
  %269 = vmatprep.subr.mxu0 %v94
  %270 = vmatpush1.msra.mxu0 %v93
  %271 = vmatprep.subr.mxu0 %v98
  %272 = vmatpush1.msra.mxu0 %v97
  %273 = vmatprep.subr.mxu0 %v102
  %274 = vmatpush1.msra.mxu0 %v101
  %275 = vmatprep.subr.mxu0 %v106
  %276 = vmatpush1.msra.mxu0 %v105
  %277 = vmatprep.subr.mxu0 %v110
  %278 = vmatpush1.msra.mxu0 %v109
  %279 = vmatprep.subr.mxu0 %v114
  %280 = vmatpush1.msra.mxu0 %v113
  %281 = vmatprep.subr.mxu0 %v118
  %282 = vmatpush1.msra.mxu0 %v117
  %283 = vmatprep.subr.mxu0 %v122
  %284 = vmatpush1.msra.mxu0 %v121
  %285 = vmatprep.subr.mxu0 %v126
  %286 = vmatpush1.msra.mxu0 %v125
  %287 = vmatprep.subr.mxu0 %v130
  %288 = vmatpush1.msra.mxu0 %v129
  %289 = vmatprep.subr.mxu0 %v134
  %290 = vmatpush1.msra.mxu0 %v133
  %291 = vmatprep.subr.mxu0 %v138
  %292 = vmatpush1.msra.mxu0 %v137
  %293 = vmatprep.subr.mxu0 %v142
  %294 = vmatpush1.msra.mxu0 %v141
  %295 = vmatprep.mubr.f32.mxu0 %v15
  %296 = vmatmul.mubr.f32.gmra.mrb[0].mxu0 %v14
  %v297 = vpop.f32.mrb[0].mxu0
  %v298 = vadd.f32 %v214, %v297
  %v299 = vpop.f32.mrb[0].mxu0
  %v300 = vadd.f32 %v218, %v299
  %301 = vdwg.mxu0
  %302 = vmatprep.subr.mxu0 %v146
  %303 = vmatpush1.msra.mxu0 %v145
  %304 = vmatprep.subr.mxu0 %v150
  %305 = vmatpush1.msra.mxu0 %v149
  %306 = vmatprep.subr.mxu0 %v154
  %307 = vmatpush1.msra.mxu0 %v153
  %308 = vmatprep.subr.mxu0 %v158
  %309 = vmatpush1.msra.mxu0 %v157
  %310 = vmatprep.subr.mxu0 %v162
  %311 = vmatpush1.msra.mxu0 %v161
  %312 = vmatprep.subr.mxu0 %v166
  %313 = vmatpush1.msra.mxu0 %v165
  %314 = vmatprep.subr.mxu0 %v170
  %315 = vmatpush1.msra.mxu0 %v169
  %316 = vmatprep.subr.mxu0 %v174
  %317 = vmatpush1.msra.mxu0 %v173
  %318 = vmatprep.subr.mxu0 %v178
  %319 = vmatpush1.msra.mxu0 %v177
  %320 = vmatprep.subr.mxu0 %v182
  %321 = vmatpush1.msra.mxu0 %v181
  %322 = vmatprep.subr.mxu0 %v186
  %323 = vmatpush1.msra.mxu0 %v185
  %324 = vmatprep.subr.mxu0 %v190
  %325 = vmatpush1.msra.mxu0 %v189
  %326 = vmatprep.subr.mxu0 %v194
  %327 = vmatpush1.msra.mxu0 %v193
  %328 = vmatprep.subr.mxu0 %v198
  %329 = vmatpush1.msra.mxu0 %v197
  %330 = vmatprep.subr.mxu0 %v202
  %331 = vmatpush1.msra.mxu0 %v201
  %332 = vmatprep.subr.mxu0 %v206
  %333 = vmatpush1.msra.mxu0 %v205
  %334 = vmatprep.subr.mxu0 0.0
  %335 = vmatpush1.msra.mxu0 0.0
  %336 = vmatprep.subr.mxu0 0.0
  %337 = vmatpush1.msra.mxu0 0.0
  %338 = vmatprep.subr.mxu0 0.0
  %339 = vmatpush1.msra.mxu0 0.0
  %340 = vmatprep.subr.mxu0 0.0
  %341 = vmatpush1.msra.mxu0 0.0
  %342 = vmatprep.subr.mxu0 0.0
  %343 = vmatpush1.msra.mxu0 0.0
  %344 = vmatprep.subr.mxu0 0.0
  %345 = vmatpush1.msra.mxu0 0.0
  %346 = vmatprep.subr.mxu0 0.0
  %347 = vmatpush1.msra.mxu0 0.0
  %348 = vmatprep.subr.mxu0 0.0
  %349 = vmatpush1.msra.mxu0 0.0
  %350 = vmatprep.subr.mxu0 0.0
  %351 = vmatpush1.msra.mxu0 0.0
  %352 = vmatprep.subr.mxu0 0.0
  %353 = vmatpush1.msra.mxu0 0.0
  %354 = vmatprep.subr.mxu0 0.0
  %355 = vmatpush1.msra.mxu0 0.0
  %356 = vmatprep.subr.mxu0 0.0
  %357 = vmatpush1.msra.mxu0 0.0
  %358 = vmatprep.subr.mxu0 0.0
  %359 = vmatpush1.msra.mxu0 0.0
  %360 = vmatprep.subr.mxu0 0.0
  %361 = vmatpush1.msra.mxu0 0.0
  %362 = vmatprep.subr.mxu0 0.0
  %363 = vmatpush1.msra.mxu0 0.0
  %364 = vmatprep.subr.mxu0 0.0
  %365 = vmatpush1.msra.mxu0 0.0
  %366 = vmatprep.mubr.f32.mxu0 0.0
  %367 = vmatmul.mubr.f32.gmra.mrb[0].mxu0 %v16
  %v368 = vpop.f32.mrb[0].mxu0
  %v369 = vadd.f32 %v298, %v368
  %v370 = vpop.f32.mrb[0].mxu0
  %v371 = vadd.f32 %v300, %v370
  %372 = vdwg.mxu0
  %373 = vmatprep.subr.mxu0 %v20
  %374 = vmatpush1.msra.mxu0 %v19
  %375 = vmatprep.subr.mxu0 %v24
  %376 = vmatpush1.msra.mxu0 %v23
  %377 = vmatprep.subr.mxu0 %v28
  %378 = vmatpush1.msra.mxu0 %v27
  %379 = vmatprep.subr.mxu0 %v32
  %380 = vmatpush1.msra.mxu0 %v31
  %381 = vmatprep.subr.mxu0 %v36
  %382 = vmatpush1.msra.mxu0 %v35
  %383 = vmatprep.subr.mxu0 %v40
  %384 = vmatpush1.msra.mxu0 %v39
  %385 = vmatprep.subr.mxu0 %v44
  %386 = vmatpush1.msra.mxu0 %v43
  %387 = vmatprep.subr.mxu0 %v48
  %388 = vmatpush1.msra.mxu0 %v47
  %389 = vmatprep.subr.mxu0 %v52
  %390 = vmatpush1.msra.mxu0 %v51
  %391 = vmatprep.subr.mxu0 %v56
  %392 = vmatpush1.msra.mxu0 %v55
  %393 = vmatprep.subr.mxu0 %v60
  %394 = vmatpush1.msra.mxu0 %v59
  %395 = vmatprep.subr.mxu0 %v64
  %396 = vmatpush1.msra.mxu0 %v63
  %397 = vmatprep.subr.mxu0 %v68
  %398 = vmatpush1.msra.mxu0 %v67
  %399 = vmatprep.subr.mxu0 %v72
  %400 = vmatpush1.msra.mxu0 %v71
  %401 = vmatprep.subr.mxu0 %v76
  %402 = vmatpush1.msra.mxu0 %v75
  %403 = vmatprep.subr.mxu0 %v80
  %404 = vmatpush1.msra.mxu0 %v79
  %405 = vmatprep.subr.mxu0 %v84
  %406 = vmatpush1.msra.mxu0 %v83
  %407 = vmatprep.subr.mxu0 %v88
  %408 = vmatpush1.msra.mxu0 %v87
  %409 = vmatprep.subr.mxu0 %v92
  %410 = vmatpush1.msra.mxu0 %v91
  %411 = vmatprep.subr.mxu0 %v96
  %412 = vmatpush1.msra.mxu0 %v95
  %413 = vmatprep.subr.mxu0 %v100
  %414 = vmatpush1.msra.mxu0 %v99
  %415 = vmatprep.subr.mxu0 %v104
  %416 = vmatpush1.msra.mxu0 %v103
  %417 = vmatprep.subr.mxu0 %v108
  %418 = vmatpush1.msra.mxu0 %v107
  %419 = vmatprep.subr.mxu0 %v112
  %420 = vmatpush1.msra.mxu0 %v111
  %421 = vmatprep.subr.mxu0 %v116
  %422 = vmatpush1.msra.mxu0 %v115
  %423 = vmatprep.subr.mxu0 %v120
  %424 = vmatpush1.msra.mxu0 %v119
  %425 = vmatprep.subr.mxu0 %v124
  %426 = vmatpush1.msra.mxu0 %v123
  %427 = vmatprep.subr.mxu0 %v128
  %428 = vmatpush1.msra.mxu0 %v127
  %429 = vmatprep.subr.mxu0 %v132
  %430 = vmatpush1.msra.mxu0 %v131
  %431 = vmatprep.subr.mxu0 %v136
  %432 = vmatpush1.msra.mxu0 %v135
  %433 = vmatprep.subr.mxu0 %v140
  %434 = vmatpush1.msra.mxu0 %v139
  %435 = vmatprep.subr.mxu0 %v144
  %436 = vmatpush1.msra.mxu0 %v143
  %437 = vmatprep.mubr.f32.mxu0 %v15
  %438 = vmatmul.mubr.f32.gmra.mrb[0].mxu0 %v14
  %v439 = vpop.f32.mrb[0].mxu0
  %v440 = vadd.f32 %v222, %v439
  %v441 = vpop.f32.mrb[0].mxu0
  %v442 = vadd.f32 %v226, %v441
  %443 = vdwg.mxu0
  %444 = vmatprep.subr.mxu0 %v148
  %445 = vmatpush1.msra.mxu0 %v147
  %446 = vmatprep.subr.mxu0 %v152
  %447 = vmatpush1.msra.mxu0 %v151
  %448 = vmatprep.subr.mxu0 %v156
  %449 = vmatpush1.msra.mxu0 %v155
  %450 = vmatprep.subr.mxu0 %v160
  %451 = vmatpush1.msra.mxu0 %v159
  %452 = vmatprep.subr.mxu0 %v164
  %453 = vmatpush1.msra.mxu0 %v163
  %454 = vmatprep.subr.mxu0 %v168
  %455 = vmatpush1.msra.mxu0 %v167
  %456 = vmatprep.subr.mxu0 %v172
  %457 = vmatpush1.msra.mxu0 %v171
  %458 = vmatprep.subr.mxu0 %v176
  %459 = vmatpush1.msra.mxu0 %v175
  %460 = vmatprep.subr.mxu0 %v180
  %461 = vmatpush1.msra.mxu0 %v179
  %462 = vmatprep.subr.mxu0 %v184
  %463 = vmatpush1.msra.mxu0 %v183
  %464 = vmatprep.subr.mxu0 %v188
  %465 = vmatpush1.msra.mxu0 %v187
  %466 = vmatprep.subr.mxu0 %v192
  %467 = vmatpush1.msra.mxu0 %v191
  %468 = vmatprep.subr.mxu0 %v196
  %469 = vmatpush1.msra.mxu0 %v195
  %470 = vmatprep.subr.mxu0 %v200
  %471 = vmatpush1.msra.mxu0 %v199
  %472 = vmatprep.subr.mxu0 %v204
  %473 = vmatpush1.msra.mxu0 %v203
  %474 = vmatprep.subr.mxu0 %v208
  %475 = vmatpush1.msra.mxu0 %v207
  %476 = vmatprep.subr.mxu0 0.0
  %477 = vmatpush1.msra.mxu0 0.0
  %478 = vmatprep.subr.mxu0 0.0
  %479 = vmatpush1.msra.mxu0 0.0
  %480 = vmatprep.subr.mxu0 0.0
  %481 = vmatpush1.msra.mxu0 0.0
  %482 = vmatprep.subr.mxu0 0.0
  %483 = vmatpush1.msra.mxu0 0.0
  %484 = vmatprep.subr.mxu0 0.0
  %485 = vmatpush1.msra.mxu0 0.0
  %486 = vmatprep.subr.mxu0 0.0
  %487 = vmatpush1.msra.mxu0 0.0
  %488 = vmatprep.subr.mxu0 0.0
  %489 = vmatpush1.msra.mxu0 0.0
  %490 = vmatprep.subr.mxu0 0.0
  %491 = vmatpush1.msra.mxu0 0.0
  %492 = vmatprep.subr.mxu0 0.0
  %493 = vmatpush1.msra.mxu0 0.0
  %494 = vmatprep.subr.mxu0 0.0
  %495 = vmatpush1.msra.mxu0 0.0
  %496 = vmatprep.subr.mxu0 0.0
  %497 = vmatpush1.msra.mxu0 0.0
  %498 = vmatprep.subr.mxu0 0.0
  %499 = vmatpush1.msra.mxu0 0.0
  %500 = vmatprep.subr.mxu0 0.0
  %501 = vmatpush1.msra.mxu0 0.0
  %502 = vmatprep.subr.mxu0 0.0
  %503 = vmatpush1.msra.mxu0 0.0
  %504 = vmatprep.subr.mxu0 0.0
  %505 = vmatpush1.msra.mxu0 0.0
  %506 = vmatprep.subr.mxu0 0.0
  %507 = vmatpush1.msra.mxu0 0.0
  %508 = vmatprep.mubr.f32.mxu0 0.0
  %509 = vmatmul.mubr.f32.gmra.mrb[0].mxu0 %v16
  %v510 = vpop.f32.mrb[0].mxu0
  %v511 = vadd.f32 %v440, %v510
  %v512 = vpop.f32.mrb[0].mxu0
  %v513 = vadd.f32 %v442, %v512
  %514 = vdwg.mxu0
  %v515 = vmax.f32 %v369, 0.0
  %v516 = vmax.f32 %v371, 0.0
  %v517 = vmax.f32 %v511, 0.0
  %v518 = vmax.f32 %v513, 0.0
  %v519 = vmin.f32 %v515, 1.0
  %v520 = vmin.f32 %v516, 1.0
  %v521 = vmin.f32 %v517, 1.0
  %v522 = vmin.f32 %v518, 1.0
  %523 = vst [vmem:[%s3] sm:$0xff] %v519
  %524 = vst [vmem:[%s3 + $0x8] sm:$0xff] %v520
  %525 = vst [vmem:[%s3 + $0x10] sm:$0xff] %v521
  %526 = vst [vmem:[%s3 + $0x18] sm:$0xff] %v522
  // Predicated region
  $region14: #{linear_hardsigmoid.1} parent=0 // pred_check
    _
  $region15: #{linear_hardsigmoid.1} parent=0 // pred_check_branch
    %528 = sbr.rel (0) target = $region17
  $region16: #{linear_hardsigmoid.1} parent=0 // pred_region
    _
  $region17: #{linear_hardsigmoid.1} parent=0 // pred_fallthru
    _
  // Predicated region
  $region18: #{linear_hardsigmoid.1} parent=0 // pred_check
    _
  $region19: #{linear_hardsigmoid.1} parent=0 // pred_check_branch
    %530 = sbr.rel (0) target = $region21
  $region20: #{linear_hardsigmoid.1} parent=0 // pred_region
    _
  $region21: #{linear_hardsigmoid.1} parent=0 // pred_fallthru
    _

</llo_original>
